<compile_context>
chip_gen: v6e
topology: v6e:2x2x1
jax: 0.10.0
libtpu: 0.0.40
codegen_flags: <defaults>
</compile_context>

<pallas_src>
import jax
import jax.numpy as jnp
from jax.experimental import pallas as pl
from jax.experimental.pallas import tpu as pltpu

LOG_STD_MAX = 2.0
LOG_STD_MIN = -5.0

HIDDEN = 512
TILE_B = 256  # batch tile for the gridded (large-batch) path


def make_actor_kernel(act_dim):
    def actor_kernel(x_ref, w1_ref, w2_ref, wh_ref, b_ref, out_ref):
        # Static slices of the packed bias ref (views, no copies).
        b1 = b_ref[:, 0:HIDDEN]
        b2 = b_ref[:, HIDDEN:2 * HIDDEN]
        bh = b_ref[:, 2 * HIDDEN:2 * HIDDEN + 2 * act_dim]

        # fc1 + relu   (bf16 operands -> f32 MXU accumulator, f32 bias/relu)
        h1 = jnp.dot(x_ref[...].astype(jnp.bfloat16), w1_ref[...],
                     preferred_element_type=jnp.float32)
        h1 = jnp.maximum(h1 + b1, 0.0)

        # fc2 + relu
        h2 = jnp.dot(h1.astype(jnp.bfloat16), w2_ref[...],
                     preferred_element_type=jnp.float32)
        h2 = jnp.maximum(h2 + b2, 0.0)

        # fused heads: columns [0, act_dim) = mean, [act_dim, 2*act_dim) = log_std
        head = jnp.dot(h2.astype(jnp.bfloat16), wh_ref[...],
                       preferred_element_type=jnp.float32) + bh

        # tanh squash + rescale into [LOG_STD_MIN, LOG_STD_MAX], applied only to
        # the log_std half via a lane-index select (tanh on the mean half runs
        # on the EUP and is discarded -- free off the critical path at this size).
        squashed = LOG_STD_MIN + 0.5 * (LOG_STD_MAX - LOG_STD_MIN) * (jnp.tanh(head) + 1.0)
        col = jax.lax.broadcasted_iota(jnp.int32, head.shape, 1)
        out_ref[...] = jnp.where(col < act_dim, head, squashed)

    return actor_kernel


def actor_forward(x, params):
    """x: (B, obs_dim) float32. Returns (mean, log_std), each (B, act_dim) float32."""
    w1, w2, wh, b_all = params
    B, obs_dim = x.shape
    two_a = wh.shape[1]
    act_dim = two_a // 2
    kernel = make_actor_kernel(act_dim)

    if B <= TILE_B:
        # Gridless single-shot path (everything fits in VMEM; ~1.2 MiB).
        full = lambda shape: pl.BlockSpec(shape, lambda: (0,) * len(shape))
        out = pl.pallas_call(
            kernel,
            out_shape=jax.ShapeDtypeStruct((B, two_a), jnp.float32),
            in_specs=[
                full(x.shape),
                full(w1.shape), full(w2.shape), full(wh.shape),
                full(b_all.shape),
            ],
            out_specs=full((B, two_a)),
        )(x, w1, w2, wh, b_all)
    else:
        # Large-batch path: "parallel" grid over 256-row batch tiles (shards
        # across v7x's 2 TensorCores); weights pinned resident via constant
        # index_maps so the 544 KB weight stream is amortized over the batch.
        b_pad = pl.cdiv(B, TILE_B) * TILE_B
        x_in = jnp.pad(x, ((0, b_pad - B), (0, 0))) if b_pad != B else x
        out = pl.pallas_call(
            kernel,
            out_shape=jax.ShapeDtypeStruct((b_pad, two_a), jnp.float32),
            grid=(b_pad // TILE_B,),
            in_specs=[
                pl.BlockSpec((TILE_B, obs_dim), lambda i: (i, 0)),
                pl.BlockSpec(w1.shape, lambda i: (0, 0)),
                pl.BlockSpec(w2.shape, lambda i: (0, 0)),
                pl.BlockSpec(wh.shape, lambda i: (0, 0)),
                pl.BlockSpec(b_all.shape, lambda i: (0, 0)),
            ],
            out_specs=pl.BlockSpec((TILE_B, two_a), lambda i: (i, 0)),
            compiler_params=pltpu.CompilerParams(
                dimension_semantics=("parallel",)),
        )(x_in, w1, w2, wh, b_all)
        out = out[:B]

    mean = out[:, :act_dim]
    log_std = out[:, act_dim:]
    return mean, log_std


def init_params(key, obs_dim, act_dim):
    """Init mirroring nn.Linear's U(-1/sqrt(fan_in), 1/sqrt(fan_in)).

    Weights stored (in_features, out_features) in bfloat16 (HBM traffic is the
    bottleneck). The two head layers are fused into one (HIDDEN, 2*act_dim)
    weight; all biases are packed into one (1, 2*HIDDEN + 2*act_dim) f32 array
    so the kernel takes 5 inputs instead of 7."""
    def linear(key, fan_in, fan_out):
        kw, kb = jax.random.split(key)
        bound = 1.0 / jnp.sqrt(fan_in)
        w = jax.random.uniform(kw, (fan_in, fan_out), jnp.float32, -bound, bound)
        b = jax.random.uniform(kb, (1, fan_out), jnp.float32, -bound, bound)
        return w.astype(jnp.bfloat16), b

    k1, k2, k3, k4 = jax.random.split(key, 4)
    w1, b1 = linear(k1, obs_dim, HIDDEN)
    w2, b2 = linear(k2, HIDDEN, HIDDEN)
    wm, bm = linear(k3, HIDDEN, act_dim)
    wl, bl = linear(k4, HIDDEN, act_dim)
    wh = jnp.concatenate([wm, wl], axis=1)            # (HIDDEN, 2*act_dim): [mean | log_std]
    b_all = jnp.concatenate([b1, b2, bm, bl], axis=1)  # (1, 2*HIDDEN + 2*act_dim)
    return (w1, w2, wh, b_all)


def actor_forward_ref(x, params):
    """Pure-JAX reference with identical numerics (bf16 operands, f32 accum)."""
    w1, w2, wh, b_all = params
    act_dim = wh.shape[1] // 2
    b1 = b_all[:, :HIDDEN]
    b2 = b_all[:, HIDDEN:2 * HIDDEN]
    bh = b_all[:, 2 * HIDDEN:]
    dot = lambda a, w: jnp.dot(a.astype(jnp.bfloat16), w,
                               preferred_element_type=jnp.float32)
    h = jnp.maximum(dot(x, w1) + b1, 0.0)
    h = jnp.maximum(dot(h, w2) + b2, 0.0)
    head = dot(h, wh) + bh
    mean = head[:, :act_dim]
    log_std = jnp.tanh(head[:, act_dim:])
    log_std = LOG_STD_MIN + 0.5 * (LOG_STD_MAX - LOG_STD_MIN) * (log_std + 1.0)
    return mean, log_std


if __name__ == "__main__":
    key = jax.random.PRNGKey(0)
    k_param, k_x, k_xl = jax.random.split(key, 3)

    batch = 8
    obs_dim = 16    # prod(env.observation_space.shape)
    act_dim = 8     # prod(env.action_space.shape)

    params = init_params(k_param, obs_dim, act_dim)

    # --- small-batch (gridless) path: the common single-env inference case ---
    x = jax.random.normal(k_x, (batch, obs_dim), jnp.float32)
    mean, log_std = actor_forward(x, params)
    jax.block_until_ready((mean, log_std))

    mean_ref, log_std_ref = actor_forward_ref(x, params)
    assert mean.shape == (batch, act_dim) and log_std.shape == (batch, act_dim)
    assert jnp.allclose(mean, mean_ref, atol=1e-3, rtol=1e-3)
    assert jnp.allclose(log_std, log_std_ref, atol=1e-3, rtol=1e-3)
    assert jnp.all(log_std >= LOG_STD_MIN) and jnp.all(log_std <= LOG_STD_MAX)

    # --- large-batch (parallel batch grid) path: amortizes the weight DMA ---
    big_b = 512
    xl = jax.random.normal(k_xl, (big_b, obs_dim), jnp.float32)
    mean_l, log_std_l = actor_forward(xl, params)
    jax.block_until_ready((mean_l, log_std_l))
    mean_lr, log_std_lr = actor_forward_ref(xl, params)
    assert mean_l.shape == (big_b, act_dim) and log_std_l.shape == (big_b, act_dim)
    assert jnp.allclose(mean_l, mean_lr, atol=1e-3, rtol=1e-3)
    assert jnp.allclose(log_std_l, log_std_lr, atol=1e-3, rtol=1e-3)

    print("KERNEL_OK")
</pallas_src>

<mosaic_0001>
module attributes {stable_mosaic.version = 11 : i64} {
  func.func @actor_kernel(%arg0: memref<8x16xf32, #tpu.memory_space<vmem>>, %arg1: memref<16x512xbf16, #tpu.memory_space<vmem>>, %arg2: memref<512x512xbf16, #tpu.memory_space<vmem>>, %arg3: memref<512x16xbf16, #tpu.memory_space<vmem>>, %arg4: memref<1x1040xf32, #tpu.memory_space<vmem>>, %arg5: memref<8x16xf32, #tpu.memory_space<vmem>>) attributes {dimension_semantics = [], scalar_prefetch = 0 : i64, scratch_operands = 0 : i64, tpu.core_type = #tpu.core_type<tc>} {
    %c0 = arith.constant 0 : index
    %c0_0 = arith.constant 0 : index
    %0 = vector.load %arg4[%c0, %c0_0] : memref<1x1040xf32, #tpu.memory_space<vmem>>, vector<1x512xf32>
    %c0_1 = arith.constant 0 : index
    %c512 = arith.constant 512 : index
    %1 = vector.load %arg4[%c0_1, %c512] : memref<1x1040xf32, #tpu.memory_space<vmem>>, vector<1x512xf32>
    %c0_2 = arith.constant 0 : index
    %c1024 = arith.constant 1024 : index
    %2 = vector.load %arg4[%c0_2, %c1024] : memref<1x1040xf32, #tpu.memory_space<vmem>>, vector<1x16xf32>
    %c0_3 = arith.constant 0 : index
    %c0_4 = arith.constant 0 : index
    %3 = vector.load %arg0[%c0_3, %c0_4] : memref<8x16xf32, #tpu.memory_space<vmem>>, vector<8x16xf32>
    %4 = arith.truncf %3 : vector<8x16xf32> to vector<8x16xbf16>
    %c0_5 = arith.constant 0 : index
    %c0_6 = arith.constant 0 : index
    %5 = vector.load %arg1[%c0_5, %c0_6] : memref<16x512xbf16, #tpu.memory_space<vmem>>, vector<16x512xbf16>
    %cst = arith.constant dense<0.000000e+00> : vector<8x512xf32>
    %6 = tpu.matmul %4, %5, %cst {dimension_numbers = #tpu.dot_dimension_numbers<[1], [0], [0], [1], [0, 0, 1, 1], [], []>} : vector<8x16xbf16>, vector<16x512xbf16>, vector<8x512xf32> -> vector<8x512xf32>
    %7 = vector.broadcast %0 : vector<1x512xf32> to vector<8x512xf32>
    %8 = arith.addf %6, %7 : vector<8x512xf32>
    %cst_7 = arith.constant 0.000000e+00 : f32
    %9 = vector.broadcast %cst_7 : f32 to vector<8x512xf32>
    %10 = arith.maximumf %8, %9 : vector<8x512xf32>
    %11 = arith.truncf %10 : vector<8x512xf32> to vector<8x512xbf16>
    %c0_8 = arith.constant 0 : index
    %c0_9 = arith.constant 0 : index
    %12 = vector.load %arg2[%c0_8, %c0_9] : memref<512x512xbf16, #tpu.memory_space<vmem>>, vector<512x512xbf16>
    %cst_10 = arith.constant dense<0.000000e+00> : vector<8x512xf32>
    %13 = tpu.matmul %11, %12, %cst_10 {dimension_numbers = #tpu.dot_dimension_numbers<[1], [0], [0], [1], [0, 0, 1, 1], [], []>} : vector<8x512xbf16>, vector<512x512xbf16>, vector<8x512xf32> -> vector<8x512xf32>
    %14 = vector.broadcast %1 : vector<1x512xf32> to vector<8x512xf32>
    %15 = arith.addf %13, %14 : vector<8x512xf32>
    %cst_11 = arith.constant 0.000000e+00 : f32
    %16 = vector.broadcast %cst_11 : f32 to vector<8x512xf32>
    %17 = arith.maximumf %15, %16 : vector<8x512xf32>
    %18 = arith.truncf %17 : vector<8x512xf32> to vector<8x512xbf16>
    %c0_12 = arith.constant 0 : index
    %c0_13 = arith.constant 0 : index
    %19 = vector.load %arg3[%c0_12, %c0_13] : memref<512x16xbf16, #tpu.memory_space<vmem>>, vector<512x16xbf16>
    %cst_14 = arith.constant dense<0.000000e+00> : vector<8x16xf32>
    %20 = tpu.matmul %18, %19, %cst_14 {dimension_numbers = #tpu.dot_dimension_numbers<[1], [0], [0], [1], [0, 0, 1, 1], [], []>} : vector<8x512xbf16>, vector<512x16xbf16>, vector<8x16xf32> -> vector<8x16xf32>
    %21 = vector.broadcast %2 : vector<1x16xf32> to vector<8x16xf32>
    %22 = arith.addf %20, %21 : vector<8x16xf32>
    %23 = math.tanh %22 : vector<8x16xf32>
    %cst_15 = arith.constant 1.000000e+00 : f32
    %24 = vector.broadcast %cst_15 : f32 to vector<8x16xf32>
    %25 = arith.addf %23, %24 : vector<8x16xf32>
    %cst_16 = arith.constant 3.500000e+00 : f32
    %26 = vector.broadcast %cst_16 : f32 to vector<8x16xf32>
    %27 = arith.mulf %26, %25 : vector<8x16xf32>
    %cst_17 = arith.constant -5.000000e+00 : f32
    %28 = vector.broadcast %cst_17 : f32 to vector<8x16xf32>
    %29 = arith.addf %28, %27 : vector<8x16xf32>
    %30 = tpu.iota {dimensions = array<i32: 1>} : vector<8x16xi32>
    %c8_i32 = arith.constant 8 : i32
    %31 = vector.broadcast %c8_i32 : i32 to vector<8x16xi32>
    %32 = arith.cmpi slt, %30, %31 : vector<8x16xi32>
    %33 = arith.select %32, %22, %29 : vector<8x16xi1>, vector<8x16xf32>
    %c0_18 = arith.constant 0 : index
    %c0_19 = arith.constant 0 : index
    %34 = vector.load %arg5[%c0_18, %c0_19] : memref<8x16xf32, #tpu.memory_space<vmem>>, vector<8x16xf32>
    tpu.vector_store %arg5[%c0_18, %c0_19], %33 {strides = array<i32>} : memref<8x16xf32, #tpu.memory_space<vmem>>, vector<8x16xf32>,
    return
  }
}

</mosaic_0001>

<llo_original>
// kernel: tpu_custom_call.1
$region0: #{tpu_custom_call.1}
  #allocation0 [shape = 'u32[]', space=smem, size = 0x4, offset = 0x4, fixed_abs, tag = 'smem constant byte address 0x4 - core index']
  #allocation1 [shape = 'u32[144,128]{1,0:T(1,128)}', space=vmem, size = 0x12000, scoped, tag = 'internal scratch']
  %s0 = inlined_call_operand.vmem [shape: f32[8,16], index: 0, kind: input, shape index: {}]
  %s1 = inlined_call_operand.vmem [shape: bf16[16,512], index: 1, kind: input, shape index: {}]
  %s2 = inlined_call_operand.hbm [shape: bf16[512,512], index: 2, kind: input, shape index: {}]
  %s3 = inlined_call_operand.vmem [shape: bf16[512,16], index: 3, kind: input, shape index: {}]
  %s4 = inlined_call_operand.vmem [shape: f32[1,1040], index: 4, kind: input, shape index: {}]
  %s5 = inlined_call_operand.hbm [shape: f32[8,16], index: 5, kind: output, shape index: {}]
  %s6 = sld [smem:[#allocation0]]
  $region34: #{tpu_custom_call.1} parent=0
    _
  %s8 = ssub.s32 1, %s6
  %s9 = scalar_select 0, %s8, %s6
  $region1: #{tpu_custom_call.1} parent=0
    #allocation2 [shape = 'u8[524288]{0}', space=vmem, size = 0x80000, scoped, tag = 'input window, operand 2, single buffered']
    #allocation3 [shape = 's32[1]{0}', space=sflag, size = 0x4, scoped, tag = 'scoped memory for tpu_custom_call.1']
    #allocation4 [shape = 's32[1]{0}', space=sflag, size = 0x4, scoped, tag = 'scoped memory for tpu_custom_call.1']
    #allocation5 [shape = 'u8[4096]{0}', space=vmem, size = 0x1000, scoped, tag = 'output window, operand 0, single buffered']
    %10 = vsyncpa [#allocation3], 0
    %11 = vsyncpa [#allocation4], 0
    // Predicated region
    $region2: #{tpu_custom_call.1} parent=1 // pred_check
      _
    $region3: #{tpu_custom_call.1} parent=1 // pred_check_branch
      %13 = sbr.rel (0) target = $region5
    $region4: #{tpu_custom_call.1} parent=1 // pred_region
      _
    $region5: #{tpu_custom_call.1} parent=1 // pred_fallthru
      _
    // Predicated region
    $region6: #{tpu_custom_call.1} parent=1 // pred_check
      _
    $region7: #{tpu_custom_call.1} parent=1 // pred_check_branch
      %15 = sbr.rel (0) target = $region9
    $region8: #{tpu_custom_call.1} parent=1 // pred_region
      _
    $region9: #{tpu_custom_call.1} parent=1 // pred_fallthru
      _
    // Predicated region
    $region10: #{tpu_custom_call.1} parent=1 // pred_check
      _
    $region11: #{tpu_custom_call.1} parent=1 // pred_check_branch
      %17 = sbr.rel (0) target = $region13
    $region12: #{tpu_custom_call.1} parent=1 // pred_region
      %s19 = ssub.s32 16384, 16384
      %20 = vsyncadd [#allocation3], %s19
      %s21 = sshll.u32 [#allocation2], 4
      %s22 = int_to_ptr.vmem [resolvable:$true] %s21
      %27 = dma.hbm_to_vmem [thread:$0]  %s2, 16384, %s22, [#allocation3], 256, 256, 16
    $region13: #{tpu_custom_call.1} parent=1 // pred_fallthru
      _
    // Predicated region
    $region14: #{tpu_custom_call.1} parent=1 // pred_check
      _
    $region15: #{tpu_custom_call.1} parent=1 // pred_check_branch
      %29 = sbr.rel (0) target = $region17
    $region16: #{tpu_custom_call.1} parent=1 // pred_region
      _
    $region17: #{tpu_custom_call.1} parent=1 // pred_fallthru
      _
    // Predicated region
    $region18: #{tpu_custom_call.1} parent=1 // pred_check
      _
    $region19: #{tpu_custom_call.1} parent=1 // pred_check_branch
      %31 = sbr.rel (0) target = $region21
    $region20: #{tpu_custom_call.1} parent=1 // pred_region
      _
    $region21: #{tpu_custom_call.1} parent=1 // pred_fallthru
      _
    // Predicated region
    $region22: #{tpu_custom_call.1} parent=1 // pred_check
      _
    $region23: #{tpu_custom_call.1} parent=1 // pred_check_branch
      %33 = sbr.rel (0) target = $region25
    $region24: #{tpu_custom_call.1} parent=1 // pred_region
      %34 = dma.done [#allocation3], 16384
    $region25: #{tpu_custom_call.1} parent=1 // pred_fallthru
      _
    %v36 = vld [vmem:[%s4] sm:$0xf]
    %v37 = vld [vmem:[%s4 + $0x4] sm:$0xf]
    %v38 = vld [vmem:[%s4 + $0x8] sm:$0x1]
    %v39 = vld [vmem:[%s0] sm:$0xff]
    %v40 = vpack.c.bf16 %v39, %v39
    %v41 = vld [vmem:[%s1] sm:$0xff]
    %v42 = vld [vmem:[%s1 + $0x8] sm:$0xff]
    %v43 = vld [vmem:[%s1 + $0x10] sm:$0xff]
    %v44 = vld [vmem:[%s1 + $0x18] sm:$0xff]
    %v46 = vlaneseq
    %v47 = vshrl.u32 %v46, 7
    %v48 = vsub.s32 0, %v47
    %v49 = vrot.slane %v36, %v48
    %v50 = vlaneseq
    %v51 = vshrl.u32 %v50, 7
    %v52 = vsub.s32 1, %v51
    %v53 = vrot.slane %v36, %v52
    %v54 = vlaneseq
    %v55 = vshrl.u32 %v54, 7
    %v56 = vsub.s32 2, %v55
    %v57 = vrot.slane %v36, %v56
    %v58 = vlaneseq
    %v59 = vshrl.u32 %v58, 7
    %v60 = vsub.s32 3, %v59
    %v61 = vrot.slane %v36, %v60
    %v70 = vunpack.c.l.b16 %v41
    %v71 = vunpack.c.h.b16 %v41
    %v72 = vunpack.c.l.b16 %v42
    %v73 = vunpack.c.h.b16 %v42
    %v74 = vunpack.c.l.b16 %v43
    %v75 = vunpack.c.h.b16 %v43
    %v76 = vunpack.c.l.b16 %v44
    %v77 = vunpack.c.h.b16 %v44
    %v78 = vpack.c.b16 %v74, %v70
    %v79 = vpack.c.b16 %v75, %v71
    %v80 = vpack.c.b16 %v76, %v72
    %v81 = vpack.c.b16 %v77, %v73
    %vm86 = vcmask 130048
    %v88 = vsel %vm86, %v40, 0
    %90 = vmatprep.subr.bf16.mxu0 0
    %91 = vmatpush1.bf16.msra.mxu0 0
    %92 = vmatprep.subr.bf16.mxu0 0
    %93 = vmatpush1.bf16.msra.mxu0 0
    %94 = vmatprep.subr.bf16.mxu0 0
    %95 = vmatpush1.bf16.msra.mxu0 0
    %96 = vmatprep.subr.bf16.mxu0 0
    %97 = vmatpush1.bf16.msra.mxu0 0
    %98 = vmatprep.subr.bf16.mxu0 0
    %99 = vmatpush1.bf16.msra.mxu0 0
    %100 = vmatprep.subr.bf16.mxu0 0
    %101 = vmatpush1.bf16.msra.mxu0 0
    %102 = vmatprep.subr.bf16.mxu0 0
    %103 = vmatpush1.bf16.msra.mxu0 0
    %104 = vmatprep.subr.bf16.mxu0 %v79
    %105 = vmatpush1.bf16.msra.mxu0 %v78
    %106 = vmatprep.subr.bf16.mxu0 0
    %107 = vmatpush2.bf16.msra.mxu0 0
    %108 = vmatprep.subr.bf16.mxu0 0
    %109 = vmatpush2.bf16.msra.mxu0 0
    %110 = vmatprep.subr.bf16.mxu0 0
    %111 = vmatpush2.bf16.msra.mxu0 0
    %112 = vmatprep.subr.bf16.mxu0 0
    %113 = vmatpush2.bf16.msra.mxu0 0
    %114 = vmatprep.subr.bf16.mxu0 0
    %115 = vmatpush2.bf16.msra.mxu0 0
    %116 = vmatprep.subr.bf16.mxu0 0
    %117 = vmatpush2.bf16.msra.mxu0 0
    %118 = vmatprep.subr.bf16.mxu0 0
    %119 = vmatpush2.bf16.msra.mxu0 0
    %120 = vmatprep.subr.bf16.mxu0 0
    %121 = vmatpush2.bf16.msra.mxu0 0
    %122 = vmatprep.mubr.bf16.mxu0 0
    %123 = vmatmul.mubr.bf16.gmra.mxu0 %v88
    %v124 = vpop.f32.mrf.mxu0
    %v125 = vadd.f32 %v49, %v124
    %v126 = vpop.f32.mrf.mxu0
    %v127 = vadd.f32 %v53, %v126
    %v128 = vpop.f32.mrf.mxu0
    %v129 = vpop.f32.mrf.mxu0
    %130 = vdwg.mxu0
    %131 = vmatprep.subr.bf16.mxu0 0
    %132 = vmatpush1.bf16.msra.mxu0 0
    %133 = vmatprep.subr.bf16.mxu0 0
    %134 = vmatpush1.bf16.msra.mxu0 0
    %135 = vmatprep.subr.bf16.mxu0 0
    %136 = vmatpush1.bf16.msra.mxu0 0
    %137 = vmatprep.subr.bf16.mxu0 0
    %138 = vmatpush1.bf16.msra.mxu0 0
    %139 = vmatprep.subr.bf16.mxu0 0
    %140 = vmatpush1.bf16.msra.mxu0 0
    %141 = vmatprep.subr.bf16.mxu0 0
    %142 = vmatpush1.bf16.msra.mxu0 0
    %143 = vmatprep.subr.bf16.mxu0 0
    %144 = vmatpush1.bf16.msra.mxu0 0
    %145 = vmatprep.subr.bf16.mxu0 %v81
    %146 = vmatpush1.bf16.msra.mxu0 %v80
    %147 = vmatprep.subr.bf16.mxu0 0
    %148 = vmatpush2.bf16.msra.mxu0 0
    %149 = vmatprep.subr.bf16.mxu0 0
    %150 = vmatpush2.bf16.msra.mxu0 0
    %151 = vmatprep.subr.bf16.mxu0 0
    %152 = vmatpush2.bf16.msra.mxu0 0
    %153 = vmatprep.subr.bf16.mxu0 0
    %154 = vmatpush2.bf16.msra.mxu0 0
    %155 = vmatprep.subr.bf16.mxu0 0
    %156 = vmatpush2.bf16.msra.mxu0 0
    %157 = vmatprep.subr.bf16.mxu0 0
    %158 = vmatpush2.bf16.msra.mxu0 0
    %159 = vmatprep.subr.bf16.mxu0 0
    %160 = vmatpush2.bf16.msra.mxu0 0
    %161 = vmatprep.subr.bf16.mxu0 0
    %162 = vmatpush2.bf16.msra.mxu0 0
    %163 = vmatprep.mubr.bf16.mxu0 0
    %164 = vmatmul.mubr.bf16.gmra.mxu0 %v88
    %v165 = vpop.f32.mrf.mxu0
    %v166 = vadd.f32 %v57, %v165
    %v167 = vpop.f32.mrf.mxu0
    %v168 = vadd.f32 %v61, %v167
    %v169 = vpop.f32.mrf.mxu0
    %v170 = vpop.f32.mrf.mxu0
    %171 = vdwg.mxu0
    %v172 = vmax.f32 %v125, 0.0
    %v173 = vmax.f32 %v127, 0.0
    %v174 = vmax.f32 %v166, 0.0
    %v175 = vmax.f32 %v168, 0.0
    %v176 = vpack.c.bf16 %v172, %v172
    %v177 = vpack.c.bf16 %v173, %v173
    %v178 = vpack.c.bf16 %v174, %v174
    %v179 = vpack.c.bf16 %v175, %v175
    %v180 = vld [vmem:[#allocation2] sm:$0xff]
    %v181 = vld [vmem:[#allocation2 + $0x8] sm:$0xff]
    %v182 = vld [vmem:[#allocation2 + $0x10] sm:$0xff]
    %v183 = vld [vmem:[#allocation2 + $0x18] sm:$0xff]
    %v184 = vld [vmem:[#allocation2 + $0x20] sm:$0xff]
    %v185 = vld [vmem:[#allocation2 + $0x28] sm:$0xff]
    %v186 = vld [vmem:[#allocation2 + $0x30] sm:$0xff]
    %v187 = vld [vmem:[#allocation2 + $0x38] sm:$0xff]
    %v188 = vld [vmem:[#allocation2 + $0x40] sm:$0xff]
    %v189 = vld [vmem:[#allocation2 + $0x48] sm:$0xff]
    %v190 = vld [vmem:[#allocation2 + $0x50] sm:$0xff]
    %v191 = vld [vmem:[#allocation2 + $0x58] sm:$0xff]
    %v192 = vld [vmem:[#allocation2 + $0x60] sm:$0xff]
    %v193 = vld [vmem:[#allocation2 + $0x68] sm:$0xff]
    %v194 = vld [vmem:[#allocation2 + $0x70] sm:$0xff]
    %v195 = vld [vmem:[#allocation2 + $0x78] sm:$0xff]
    %v196 = vld [vmem:[#allocation2 + $0x80] sm:$0xff]
    %v197 = vld [vmem:[#allocation2 + $0x88] sm:$0xff]
    %v198 = vld [vmem:[#allocation2 + $0x90] sm:$0xff]
    %v199 = vld [vmem:[#allocation2 + $0x98] sm:$0xff]
    %v200 = vld [vmem:[#allocation2 + $0xa0] sm:$0xff]
    %v201 = vld [vmem:[#allocation2 + $0xa8] sm:$0xff]
    %v202 = vld [vmem:[#allocation2 + $0xb0] sm:$0xff]
    %v203 = vld [vmem:[#allocation2 + $0xb8] sm:$0xff]
    %v204 = vld [vmem:[#allocation2 + $0xc0] sm:$0xff]
    %v205 = vld [vmem:[#allocation2 + $0xc8] sm:$0xff]
    %v206 = vld [vmem:[#allocation2 + $0xd0] sm:$0xff]
    %v207 = vld [vmem:[#allocation2 + $0xd8] sm:$0xff]
    %v208 = vld [vmem:[#allocation2 + $0xe0] sm:$0xff]
    %v209 = vld [vmem:[#allocation2 + $0xe8] sm:$0xff]
    %v210 = vld [vmem:[#allocation2 + $0xf0] sm:$0xff]
    %v211 = vld [vmem:[#allocation2 + $0xf8] sm:$0xff]
    %v212 = vld [vmem:[#allocation2 + $0x100] sm:$0xff]
    %v213 = vld [vmem:[#allocation2 + $0x108] sm:$0xff]
    %v214 = vld [vmem:[#allocation2 + $0x110] sm:$0xff]
    %v215 = vld [vmem:[#allocation2 + $0x118] sm:$0xff]
    %v216 = vld [vmem:[#allocation2 + $0x120] sm:$0xff]
    %v217 = vld [vmem:[#allocation2 + $0x128] sm:$0xff]
    %v218 = vld [vmem:[#allocation2 + $0x130] sm:$0xff]
    %v219 = vld [vmem:[#allocation2 + $0x138] sm:$0xff]
    %v220 = vld [vmem:[#allocation2 + $0x140] sm:$0xff]
    %v221 = vld [vmem:[#allocation2 + $0x148] sm:$0xff]
    %v222 = vld [vmem:[#allocation2 + $0x150] sm:$0xff]
    %v223 = vld [vmem:[#allocation2 + $0x158] sm:$0xff]
    %v224 = vld [vmem:[#allocation2 + $0x160] sm:$0xff]
    %v225 = vld [vmem:[#allocation2 + $0x168] sm:$0xff]
    %v226 = vld [vmem:[#allocation2 + $0x170] sm:$0xff]
    %v227 = vld [vmem:[#allocation2 + $0x178] sm:$0xff]
    %v228 = vld [vmem:[#allocation2 + $0x180] sm:$0xff]
    %v229 = vld [vmem:[#allocation2 + $0x188] sm:$0xff]
    %v230 = vld [vmem:[#allocation2 + $0x190] sm:$0xff]
    %v231 = vld [vmem:[#allocation2 + $0x198] sm:$0xff]
    %v232 = vld [vmem:[#allocation2 + $0x1a0] sm:$0xff]
    %v233 = vld [vmem:[#allocation2 + $0x1a8] sm:$0xff]
    %v234 = vld [vmem:[#allocation2 + $0x1b0] sm:$0xff]
    %v235 = vld [vmem:[#allocation2 + $0x1b8] sm:$0xff]
    %v236 = vld [vmem:[#allocation2 + $0x1c0] sm:$0xff]
    %v237 = vld [vmem:[#allocation2 + $0x1c8] sm:$0xff]
    %v238 = vld [vmem:[#allocation2 + $0x1d0] sm:$0xff]
    %v239 = vld [vmem:[#allocation2 + $0x1d8] sm:$0xff]
    %v240 = vld [vmem:[#allocation2 + $0x1e0] sm:$0xff]
    %v241 = vld [vmem:[#allocation2 + $0x1e8] sm:$0xff]
    %v242 = vld [vmem:[#allocation2 + $0x1f0] sm:$0xff]
    %v243 = vld [vmem:[#allocation2 + $0x1f8] sm:$0xff]
    %v244 = vld [vmem:[#allocation2 + $0x200] sm:$0xff]
    %v245 = vld [vmem:[#allocation2 + $0x208] sm:$0xff]
    %v246 = vld [vmem:[#allocation2 + $0x210] sm:$0xff]
    %v247 = vld [vmem:[#allocation2 + $0x218] sm:$0xff]
    %v248 = vld [vmem:[#allocation2 + $0x220] sm:$0xff]
    %v249 = vld [vmem:[#allocation2 + $0x228] sm:$0xff]
    %v250 = vld [vmem:[#allocation2 + $0x230] sm:$0xff]
    %v251 = vld [vmem:[#allocation2 + $0x238] sm:$0xff]
    %v252 = vld [vmem:[#allocation2 + $0x240] sm:$0xff]
    %v253 = vld [vmem:[#allocation2 + $0x248] sm:$0xff]
    %v254 = vld [vmem:[#allocation2 + $0x250] sm:$0xff]
    %v255 = vld [vmem:[#allocation2 + $0x258] sm:$0xff]
    %v256 = vld [vmem:[#allocation2 + $0x260] sm:$0xff]
    %v257 = vld [vmem:[#allocation2 + $0x268] sm:$0xff]
    %v258 = vld [vmem:[#allocation2 + $0x270] sm:$0xff]
    %v259 = vld [vmem:[#allocation2 + $0x278] sm:$0xff]
    %v260 = vld [vmem:[#allocation2 + $0x280] sm:$0xff]
    %v261 = vld [vmem:[#allocation2 + $0x288] sm:$0xff]
    %v262 = vld [vmem:[#allocation2 + $0x290] sm:$0xff]
    %v263 = vld [vmem:[#allocation2 + $0x298] sm:$0xff]
    %v264 = vld [vmem:[#allocation2 + $0x2a0] sm:$0xff]
    %v265 = vld [vmem:[#allocation2 + $0x2a8] sm:$0xff]
    %v266 = vld [vmem:[#allocation2 + $0x2b0] sm:$0xff]
    %v267 = vld [vmem:[#allocation2 + $0x2b8] sm:$0xff]
    %v268 = vld [vmem:[#allocation2 + $0x2c0] sm:$0xff]
    %v269 = vld [vmem:[#allocation2 + $0x2c8] sm:$0xff]
    %v270 = vld [vmem:[#allocation2 + $0x2d0] sm:$0xff]
    %v271 = vld [vmem:[#allocation2 + $0x2d8] sm:$0xff]
    %v272 = vld [vmem:[#allocation2 + $0x2e0] sm:$0xff]
    %v273 = vld [vmem:[#allocation2 + $0x2e8] sm:$0xff]
    %v274 = vld [vmem:[#allocation2 + $0x2f0] sm:$0xff]
    %v275 = vld [vmem:[#allocation2 + $0x2f8] sm:$0xff]
    %v276 = vld [vmem:[#allocation2 + $0x300] sm:$0xff]
    %v277 = vld [vmem:[#allocation2 + $0x308] sm:$0xff]
    %v278 = vld [vmem:[#allocation2 + $0x310] sm:$0xff]
    %v279 = vld [vmem:[#allocation2 + $0x318] sm:$0xff]
    %v280 = vld [vmem:[#allocation2 + $0x320] sm:$0xff]
    %v281 = vld [vmem:[#allocation2 + $0x328] sm:$0xff]
    %v282 = vld [vmem:[#allocation2 + $0x330] sm:$0xff]
    %v283 = vld [vmem:[#allocation2 + $0x338] sm:$0xff]
    %v284 = vld [vmem:[#allocation2 + $0x340] sm:$0xff]
    %v285 = vld [vmem:[#allocation2 + $0x348] sm:$0xff]
    %v286 = vld [vmem:[#allocation2 + $0x350] sm:$0xff]
    %v287 = vld [vmem:[#allocation2 + $0x358] sm:$0xff]
    %v288 = vld [vmem:[#allocation2 + $0x360] sm:$0xff]
    %v289 = vld [vmem:[#allocation2 + $0x368] sm:$0xff]
    %v290 = vld [vmem:[#allocation2 + $0x370] sm:$0xff]
    %v291 = vld [vmem:[#allocation2 + $0x378] sm:$0xff]
    %v292 = vld [vmem:[#allocation2 + $0x380] sm:$0xff]
    %v293 = vld [vmem:[#allocation2 + $0x388] sm:$0xff]
    %v294 = vld [vmem:[#allocation2 + $0x390] sm:$0xff]
    %v295 = vld [vmem:[#allocation2 + $0x398] sm:$0xff]
    %v296 = vld [vmem:[#allocation2 + $0x3a0] sm:$0xff]
    %v297 = vld [vmem:[#allocation2 + $0x3a8] sm:$0xff]
    %v298 = vld [vmem:[#allocation2 + $0x3b0] sm:$0xff]
    %v299 = vld [vmem:[#allocation2 + $0x3b8] sm:$0xff]
    %v300 = vld [vmem:[#allocation2 + $0x3c0] sm:$0xff]
    %v301 = vld [vmem:[#allocation2 + $0x3c8] sm:$0xff]
    %v302 = vld [vmem:[#allocation2 + $0x3d0] sm:$0xff]
    %v303 = vld [vmem:[#allocation2 + $0x3d8] sm:$0xff]
    %v304 = vld [vmem:[#allocation2 + $0x3e0] sm:$0xff]
    %v305 = vld [vmem:[#allocation2 + $0x3e8] sm:$0xff]
    %v306 = vld [vmem:[#allocation2 + $0x3f0] sm:$0xff]
    %v307 = vld [vmem:[#allocation2 + $0x3f8] sm:$0xff]
    %v309 = vlaneseq
    %v310 = vshrl.u32 %v309, 7
    %v311 = vsub.s32 0, %v310
    %v312 = vrot.slane %v37, %v311
    %v313 = vlaneseq
    %v314 = vshrl.u32 %v313, 7
    %v315 = vsub.s32 1, %v314
    %v316 = vrot.slane %v37, %v315
    %v317 = vlaneseq
    %v318 = vshrl.u32 %v317, 7
    %v319 = vsub.s32 2, %v318
    %v320 = vrot.slane %v37, %v319
    %v321 = vlaneseq
    %v322 = vshrl.u32 %v321, 7
    %v323 = vsub.s32 3, %v322
    %v324 = vrot.slane %v37, %v323
    %v457 = vunpack.c.l.b16 %v180
    %v458 = vunpack.c.h.b16 %v180
    %v459 = vunpack.c.l.b16 %v181
    %v460 = vunpack.c.h.b16 %v181
    %v461 = vunpack.c.l.b16 %v182
    %v462 = vunpack.c.h.b16 %v182
    %v463 = vunpack.c.l.b16 %v183
    %v464 = vunpack.c.h.b16 %v183
    %v465 = vunpack.c.l.b16 %v184
    %v466 = vunpack.c.h.b16 %v184
    %v467 = vunpack.c.l.b16 %v185
    %v468 = vunpack.c.h.b16 %v185
    %v469 = vunpack.c.l.b16 %v186
    %v470 = vunpack.c.h.b16 %v186
    %v471 = vunpack.c.l.b16 %v187
    %v472 = vunpack.c.h.b16 %v187
    %v473 = vunpack.c.l.b16 %v188
    %v474 = vunpack.c.h.b16 %v188
    %v475 = vunpack.c.l.b16 %v189
    %v476 = vunpack.c.h.b16 %v189
    %v477 = vunpack.c.l.b16 %v190
    %v478 = vunpack.c.h.b16 %v190
    %v479 = vunpack.c.l.b16 %v191
    %v480 = vunpack.c.h.b16 %v191
    %v481 = vunpack.c.l.b16 %v192
    %v482 = vunpack.c.h.b16 %v192
    %v483 = vunpack.c.l.b16 %v193
    %v484 = vunpack.c.h.b16 %v193
    %v485 = vunpack.c.l.b16 %v194
    %v486 = vunpack.c.h.b16 %v194
    %v487 = vunpack.c.l.b16 %v195
    %v488 = vunpack.c.h.b16 %v195
    %v489 = vunpack.c.l.b16 %v196
    %v490 = vunpack.c.h.b16 %v196
    %v491 = vunpack.c.l.b16 %v197
    %v492 = vunpack.c.h.b16 %v197
    %v493 = vunpack.c.l.b16 %v198
    %v494 = vunpack.c.h.b16 %v198
    %v495 = vunpack.c.l.b16 %v199
    %v496 = vunpack.c.h.b16 %v199
    %v497 = vunpack.c.l.b16 %v200
    %v498 = vunpack.c.h.b16 %v200
    %v499 = vunpack.c.l.b16 %v201
    %v500 = vunpack.c.h.b16 %v201
    %v501 = vunpack.c.l.b16 %v202
    %v502 = vunpack.c.h.b16 %v202
    %v503 = vunpack.c.l.b16 %v203
    %v504 = vunpack.c.h.b16 %v203
    %v505 = vunpack.c.l.b16 %v204
    %v506 = vunpack.c.h.b16 %v204
    %v507 = vunpack.c.l.b16 %v205
    %v508 = vunpack.c.h.b16 %v205
    %v509 = vunpack.c.l.b16 %v206
    %v510 = vunpack.c.h.b16 %v206
    %v511 = vunpack.c.l.b16 %v207
    %v512 = vunpack.c.h.b16 %v207
    %v513 = vunpack.c.l.b16 %v208
    %v514 = vunpack.c.h.b16 %v208
    %v515 = vunpack.c.l.b16 %v209
    %v516 = vunpack.c.h.b16 %v209
    %v517 = vunpack.c.l.b16 %v210
    %v518 = vunpack.c.h.b16 %v210
    %v519 = vunpack.c.l.b16 %v211
    %v520 = vunpack.c.h.b16 %v211
    %v521 = vunpack.c.l.b16 %v212
    %v522 = vunpack.c.h.b16 %v212
    %v523 = vunpack.c.l.b16 %v213
    %v524 = vunpack.c.h.b16 %v213
    %v525 = vunpack.c.l.b16 %v214
    %v526 = vunpack.c.h.b16 %v214
    %v527 = vunpack.c.l.b16 %v215
    %v528 = vunpack.c.h.b16 %v215
    %v529 = vunpack.c.l.b16 %v216
    %v530 = vunpack.c.h.b16 %v216
    %v531 = vunpack.c.l.b16 %v217
    %v532 = vunpack.c.h.b16 %v217
    %v533 = vunpack.c.l.b16 %v218
    %v534 = vunpack.c.h.b16 %v218
    %v535 = vunpack.c.l.b16 %v219
    %v536 = vunpack.c.h.b16 %v219
    %v537 = vunpack.c.l.b16 %v220
    %v538 = vunpack.c.h.b16 %v220
    %v539 = vunpack.c.l.b16 %v221
    %v540 = vunpack.c.h.b16 %v221
    %v541 = vunpack.c.l.b16 %v222
    %v542 = vunpack.c.h.b16 %v222
    %v543 = vunpack.c.l.b16 %v223
    %v544 = vunpack.c.h.b16 %v223
    %v545 = vunpack.c.l.b16 %v224
    %v546 = vunpack.c.h.b16 %v224
    %v547 = vunpack.c.l.b16 %v225
    %v548 = vunpack.c.h.b16 %v225
    %v549 = vunpack.c.l.b16 %v226
    %v550 = vunpack.c.h.b16 %v226
    %v551 = vunpack.c.l.b16 %v227
    %v552 = vunpack.c.h.b16 %v227
    %v553 = vunpack.c.l.b16 %v228
    %v554 = vunpack.c.h.b16 %v228
    %v555 = vunpack.c.l.b16 %v229
    %v556 = vunpack.c.h.b16 %v229
    %v557 = vunpack.c.l.b16 %v230
    %v558 = vunpack.c.h.b16 %v230
    %v559 = vunpack.c.l.b16 %v231
    %v560 = vunpack.c.h.b16 %v231
    %v561 = vunpack.c.l.b16 %v232
    %v562 = vunpack.c.h.b16 %v232
    %v563 = vunpack.c.l.b16 %v233
    %v564 = vunpack.c.h.b16 %v233
    %v565 = vunpack.c.l.b16 %v234
    %v566 = vunpack.c.h.b16 %v234
    %v567 = vunpack.c.l.b16 %v235
    %v568 = vunpack.c.h.b16 %v235
    %v569 = vunpack.c.l.b16 %v236
    %v570 = vunpack.c.h.b16 %v236
    %v571 = vunpack.c.l.b16 %v237
    %v572 = vunpack.c.h.b16 %v237
    %v573 = vunpack.c.l.b16 %v238
    %v574 = vunpack.c.h.b16 %v238
    %v575 = vunpack.c.l.b16 %v239
    %v576 = vunpack.c.h.b16 %v239
    %v577 = vunpack.c.l.b16 %v240
    %v578 = vunpack.c.h.b16 %v240
    %v579 = vunpack.c.l.b16 %v241
    %v580 = vunpack.c.h.b16 %v241
    %v581 = vunpack.c.l.b16 %v242
    %v582 = vunpack.c.h.b16 %v242
    %v583 = vunpack.c.l.b16 %v243
    %v584 = vunpack.c.h.b16 %v243
    %v585 = vunpack.c.l.b16 %v244
    %v586 = vunpack.c.h.b16 %v244
    %v587 = vunpack.c.l.b16 %v245
    %v588 = vunpack.c.h.b16 %v245
    %v589 = vunpack.c.l.b16 %v246
    %v590 = vunpack.c.h.b16 %v246
    %v591 = vunpack.c.l.b16 %v247
    %v592 = vunpack.c.h.b16 %v247
    %v593 = vunpack.c.l.b16 %v248
    %v594 = vunpack.c.h.b16 %v248
    %v595 = vunpack.c.l.b16 %v249
    %v596 = vunpack.c.h.b16 %v249
    %v597 = vunpack.c.l.b16 %v250
    %v598 = vunpack.c.h.b16 %v250
    %v599 = vunpack.c.l.b16 %v251
    %v600 = vunpack.c.h.b16 %v251
    %v601 = vunpack.c.l.b16 %v252
    %v602 = vunpack.c.h.b16 %v252
    %v603 = vunpack.c.l.b16 %v253
    %v604 = vunpack.c.h.b16 %v253
    %v605 = vunpack.c.l.b16 %v254
    %v606 = vunpack.c.h.b16 %v254
    %v607 = vunpack.c.l.b16 %v255
    %v608 = vunpack.c.h.b16 %v255
    %v609 = vunpack.c.l.b16 %v256
    %v610 = vunpack.c.h.b16 %v256
    %v611 = vunpack.c.l.b16 %v257
    %v612 = vunpack.c.h.b16 %v257
    %v613 = vunpack.c.l.b16 %v258
    %v614 = vunpack.c.h.b16 %v258
    %v615 = vunpack.c.l.b16 %v259
    %v616 = vunpack.c.h.b16 %v259
    %v617 = vunpack.c.l.b16 %v260
    %v618 = vunpack.c.h.b16 %v260
    %v619 = vunpack.c.l.b16 %v261
    %v620 = vunpack.c.h.b16 %v261
    %v621 = vunpack.c.l.b16 %v262
    %v622 = vunpack.c.h.b16 %v262
    %v623 = vunpack.c.l.b16 %v263
    %v624 = vunpack.c.h.b16 %v263
    %v625 = vunpack.c.l.b16 %v264
    %v626 = vunpack.c.h.b16 %v264
    %v627 = vunpack.c.l.b16 %v265
    %v628 = vunpack.c.h.b16 %v265
    %v629 = vunpack.c.l.b16 %v266
    %v630 = vunpack.c.h.b16 %v266
    %v631 = vunpack.c.l.b16 %v267
    %v632 = vunpack.c.h.b16 %v267
    %v633 = vunpack.c.l.b16 %v268
    %v634 = vunpack.c.h.b16 %v268
    %v635 = vunpack.c.l.b16 %v269
    %v636 = vunpack.c.h.b16 %v269
    %v637 = vunpack.c.l.b16 %v270
    %v638 = vunpack.c.h.b16 %v270
    %v639 = vunpack.c.l.b16 %v271
    %v640 = vunpack.c.h.b16 %v271
    %v641 = vunpack.c.l.b16 %v272
    %v642 = vunpack.c.h.b16 %v272
    %v643 = vunpack.c.l.b16 %v273
    %v644 = vunpack.c.h.b16 %v273
    %v645 = vunpack.c.l.b16 %v274
    %v646 = vunpack.c.h.b16 %v274
    %v647 = vunpack.c.l.b16 %v275
    %v648 = vunpack.c.h.b16 %v275
    %v649 = vunpack.c.l.b16 %v276
    %v650 = vunpack.c.h.b16 %v276
    %v651 = vunpack.c.l.b16 %v277
    %v652 = vunpack.c.h.b16 %v277
    %v653 = vunpack.c.l.b16 %v278
    %v654 = vunpack.c.h.b16 %v278
    %v655 = vunpack.c.l.b16 %v279
    %v656 = vunpack.c.h.b16 %v279
    %v657 = vunpack.c.l.b16 %v280
    %v658 = vunpack.c.h.b16 %v280
    %v659 = vunpack.c.l.b16 %v281
    %v660 = vunpack.c.h.b16 %v281
    %v661 = vunpack.c.l.b16 %v282
    %v662 = vunpack.c.h.b16 %v282
    %v663 = vunpack.c.l.b16 %v283
    %v664 = vunpack.c.h.b16 %v283
    %v665 = vunpack.c.l.b16 %v284
    %v666 = vunpack.c.h.b16 %v284
    %v667 = vunpack.c.l.b16 %v285
    %v668 = vunpack.c.h.b16 %v285
    %v669 = vunpack.c.l.b16 %v286
    %v670 = vunpack.c.h.b16 %v286
    %v671 = vunpack.c.l.b16 %v287
    %v672 = vunpack.c.h.b16 %v287
    %v673 = vunpack.c.l.b16 %v288
    %v674 = vunpack.c.h.b16 %v288
    %v675 = vunpack.c.l.b16 %v289
    %v676 = vunpack.c.h.b16 %v289
    %v677 = vunpack.c.l.b16 %v290
    %v678 = vunpack.c.h.b16 %v290
    %v679 = vunpack.c.l.b16 %v291
    %v680 = vunpack.c.h.b16 %v291
    %v681 = vunpack.c.l.b16 %v292
    %v682 = vunpack.c.h.b16 %v292
    %v683 = vunpack.c.l.b16 %v293
    %v684 = vunpack.c.h.b16 %v293
    %v685 = vunpack.c.l.b16 %v294
    %v686 = vunpack.c.h.b16 %v294
    %v687 = vunpack.c.l.b16 %v295
    %v688 = vunpack.c.h.b16 %v295
    %v689 = vunpack.c.l.b16 %v296
    %v690 = vunpack.c.h.b16 %v296
    %v691 = vunpack.c.l.b16 %v297
    %v692 = vunpack.c.h.b16 %v297
    %v693 = vunpack.c.l.b16 %v298
    %v694 = vunpack.c.h.b16 %v298
    %v695 = vunpack.c.l.b16 %v299
    %v696 = vunpack.c.h.b16 %v299
    %v697 = vunpack.c.l.b16 %v300
    %v698 = vunpack.c.h.b16 %v300
    %v699 = vunpack.c.l.b16 %v301
    %v700 = vunpack.c.h.b16 %v301
    %v701 = vunpack.c.l.b16 %v302
    %v702 = vunpack.c.h.b16 %v302
    %v703 = vunpack.c.l.b16 %v303
    %v704 = vunpack.c.h.b16 %v303
    %v705 = vunpack.c.l.b16 %v304
    %v706 = vunpack.c.h.b16 %v304
    %v707 = vunpack.c.l.b16 %v305
    %v708 = vunpack.c.h.b16 %v305
    %v709 = vunpack.c.l.b16 %v306
    %v710 = vunpack.c.h.b16 %v306
    %v711 = vunpack.c.l.b16 %v307
    %v712 = vunpack.c.h.b16 %v307
    %v713 = vpack.c.b16 %v461, %v457
    %v714 = vpack.c.b16 %v462, %v458
    %v715 = vpack.c.b16 %v463, %v459
    %v716 = vpack.c.b16 %v464, %v460
    %v717 = vpack.c.b16 %v469, %v465
    %v718 = vpack.c.b16 %v470, %v466
    %v719 = vpack.c.b16 %v471, %v467
    %v720 = vpack.c.b16 %v472, %v468
    %v721 = vpack.c.b16 %v477, %v473
    %v722 = vpack.c.b16 %v478, %v474
    %v723 = vpack.c.b16 %v479, %v475
    %v724 = vpack.c.b16 %v480, %v476
    %v725 = vpack.c.b16 %v485, %v481
    %v726 = vpack.c.b16 %v486, %v482
    %v727 = vpack.c.b16 %v487, %v483
    %v728 = vpack.c.b16 %v488, %v484
    %v729 = vpack.c.b16 %v493, %v489
    %v730 = vpack.c.b16 %v494, %v490
    %v731 = vpack.c.b16 %v495, %v491
    %v732 = vpack.c.b16 %v496, %v492
    %v733 = vpack.c.b16 %v501, %v497
    %v734 = vpack.c.b16 %v502, %v498
    %v735 = vpack.c.b16 %v503, %v499
    %v736 = vpack.c.b16 %v504, %v500
    %v737 = vpack.c.b16 %v509, %v505
    %v738 = vpack.c.b16 %v510, %v506
    %v739 = vpack.c.b16 %v511, %v507
    %v740 = vpack.c.b16 %v512, %v508
    %v741 = vpack.c.b16 %v517, %v513
    %v742 = vpack.c.b16 %v518, %v514
    %v743 = vpack.c.b16 %v519, %v515
    %v744 = vpack.c.b16 %v520, %v516
    %v745 = vpack.c.b16 %v525, %v521
    %v746 = vpack.c.b16 %v526, %v522
    %v747 = vpack.c.b16 %v527, %v523
    %v748 = vpack.c.b16 %v528, %v524
    %v749 = vpack.c.b16 %v533, %v529
    %v750 = vpack.c.b16 %v534, %v530
    %v751 = vpack.c.b16 %v535, %v531
    %v752 = vpack.c.b16 %v536, %v532
    %v753 = vpack.c.b16 %v541, %v537
    %v754 = vpack.c.b16 %v542, %v538
    %v755 = vpack.c.b16 %v543, %v539
    %v756 = vpack.c.b16 %v544, %v540
    %v757 = vpack.c.b16 %v549, %v545
    %v758 = vpack.c.b16 %v550, %v546
    %v759 = vpack.c.b16 %v551, %v547
    %v760 = vpack.c.b16 %v552, %v548
    %v761 = vpack.c.b16 %v557, %v553
    %v762 = vpack.c.b16 %v558, %v554
    %v763 = vpack.c.b16 %v559, %v555
    %v764 = vpack.c.b16 %v560, %v556
    %v765 = vpack.c.b16 %v565, %v561
    %v766 = vpack.c.b16 %v566, %v562
    %v767 = vpack.c.b16 %v567, %v563
    %v768 = vpack.c.b16 %v568, %v564
    %v769 = vpack.c.b16 %v573, %v569
    %v770 = vpack.c.b16 %v574, %v570
    %v771 = vpack.c.b16 %v575, %v571
    %v772 = vpack.c.b16 %v576, %v572
    %v773 = vpack.c.b16 %v581, %v577
    %v774 = vpack.c.b16 %v582, %v578
    %v775 = vpack.c.b16 %v583, %v579
    %v776 = vpack.c.b16 %v584, %v580
    %v777 = vpack.c.b16 %v589, %v585
    %v778 = vpack.c.b16 %v590, %v586
    %v779 = vpack.c.b16 %v591, %v587
    %v780 = vpack.c.b16 %v592, %v588
    %v781 = vpack.c.b16 %v597, %v593
    %v782 = vpack.c.b16 %v598, %v594
    %v783 = vpack.c.b16 %v599, %v595
    %v784 = vpack.c.b16 %v600, %v596
    %v785 = vpack.c.b16 %v605, %v601
    %v786 = vpack.c.b16 %v606, %v602
    %v787 = vpack.c.b16 %v607, %v603
    %v788 = vpack.c.b16 %v608, %v604
    %v789 = vpack.c.b16 %v613, %v609
    %v790 = vpack.c.b16 %v614, %v610
    %v791 = vpack.c.b16 %v615, %v611
    %v792 = vpack.c.b16 %v616, %v612
    %v793 = vpack.c.b16 %v621, %v617
    %v794 = vpack.c.b16 %v622, %v618
    %v795 = vpack.c.b16 %v623, %v619
    %v796 = vpack.c.b16 %v624, %v620
    %v797 = vpack.c.b16 %v629, %v625
    %v798 = vpack.c.b16 %v630, %v626
    %v799 = vpack.c.b16 %v631, %v627
    %v800 = vpack.c.b16 %v632, %v628
    %v801 = vpack.c.b16 %v637, %v633
    %v802 = vpack.c.b16 %v638, %v634
    %v803 = vpack.c.b16 %v639, %v635
    %v804 = vpack.c.b16 %v640, %v636
    %v805 = vpack.c.b16 %v645, %v641
    %v806 = vpack.c.b16 %v646, %v642
    %v807 = vpack.c.b16 %v647, %v643
    %v808 = vpack.c.b16 %v648, %v644
    %v809 = vpack.c.b16 %v653, %v649
    %v810 = vpack.c.b16 %v654, %v650
    %v811 = vpack.c.b16 %v655, %v651
    %v812 = vpack.c.b16 %v656, %v652
    %v813 = vpack.c.b16 %v661, %v657
    %v814 = vpack.c.b16 %v662, %v658
    %v815 = vpack.c.b16 %v663, %v659
    %v816 = vpack.c.b16 %v664, %v660
    %v817 = vpack.c.b16 %v669, %v665
    %v818 = vpack.c.b16 %v670, %v666
    %v819 = vpack.c.b16 %v671, %v667
    %v820 = vpack.c.b16 %v672, %v668
    %v821 = vpack.c.b16 %v677, %v673
    %v822 = vpack.c.b16 %v678, %v674
    %v823 = vpack.c.b16 %v679, %v675
    %v824 = vpack.c.b16 %v680, %v676
    %v825 = vpack.c.b16 %v685, %v681
    %v826 = vpack.c.b16 %v686, %v682
    %v827 = vpack.c.b16 %v687, %v683
    %v828 = vpack.c.b16 %v688, %v684
    %v829 = vpack.c.b16 %v693, %v689
    %v830 = vpack.c.b16 %v694, %v690
    %v831 = vpack.c.b16 %v695, %v691
    %v832 = vpack.c.b16 %v696, %v692
    %v833 = vpack.c.b16 %v701, %v697
    %v834 = vpack.c.b16 %v702, %v698
    %v835 = vpack.c.b16 %v703, %v699
    %v836 = vpack.c.b16 %v704, %v700
    %v837 = vpack.c.b16 %v709, %v705
    %v838 = vpack.c.b16 %v710, %v706
    %v839 = vpack.c.b16 %v711, %v707
    %v840 = vpack.c.b16 %v712, %v708
    %969 = vmatprep.subr.bf16.mxu0 %v742
    %970 = vmatpush1.bf16.msra.mxu0 %v741
    %971 = vmatprep.subr.bf16.mxu0 %v738
    %972 = vmatpush1.bf16.msra.mxu0 %v737
    %973 = vmatprep.subr.bf16.mxu0 %v734
    %974 = vmatpush1.bf16.msra.mxu0 %v733
    %975 = vmatprep.subr.bf16.mxu0 %v730
    %976 = vmatpush1.bf16.msra.mxu0 %v729
    %977 = vmatprep.subr.bf16.mxu0 %v726
    %978 = vmatpush1.bf16.msra.mxu0 %v725
    %979 = vmatprep.subr.bf16.mxu0 %v722
    %980 = vmatpush1.bf16.msra.mxu0 %v721
    %981 = vmatprep.subr.bf16.mxu0 %v718
    %982 = vmatpush1.bf16.msra.mxu0 %v717
    %983 = vmatprep.subr.bf16.mxu0 %v714
    %984 = vmatpush1.bf16.msra.mxu0 %v713
    %985 = vmatprep.subr.bf16.mxu0 %v774
    %986 = vmatpush2.bf16.msra.mxu0 %v773
    %987 = vmatprep.subr.bf16.mxu0 %v770
    %988 = vmatpush2.bf16.msra.mxu0 %v769
    %989 = vmatprep.subr.bf16.mxu0 %v766
    %990 = vmatpush2.bf16.msra.mxu0 %v765
    %991 = vmatprep.subr.bf16.mxu0 %v762
    %992 = vmatpush2.bf16.msra.mxu0 %v761
    %993 = vmatprep.subr.bf16.mxu0 %v758
    %994 = vmatpush2.bf16.msra.mxu0 %v757
    %995 = vmatprep.subr.bf16.mxu0 %v754
    %996 = vmatpush2.bf16.msra.mxu0 %v753
    %997 = vmatprep.subr.bf16.mxu0 %v750
    %998 = vmatpush2.bf16.msra.mxu0 %v749
    %999 = vmatprep.subr.bf16.mxu0 %v746
    %1000 = vmatpush2.bf16.msra.mxu0 %v745
    %1001 = vmatprep.mubr.bf16.mxu0 %v177
    %1002 = vmatmul.mubr.bf16.gmra.mxu0 %v176
    %v1003 = vpop.f32.mrf.mxu0
    %v1004 = vadd.f32 %v312, %v1003
    %v1005 = vpop.f32.mrf.mxu0
    %v1006 = vadd.f32 %v316, %v1005
    %v1007 = vpop.f32.mrf.mxu0
    %v1008 = vpop.f32.mrf.mxu0
    %1009 = vdwg.mxu0
    %1010 = vmatprep.subr.bf16.mxu0 %v806
    %1011 = vmatpush1.bf16.msra.mxu0 %v805
    %1012 = vmatprep.subr.bf16.mxu0 %v802
    %1013 = vmatpush1.bf16.msra.mxu0 %v801
    %1014 = vmatprep.subr.bf16.mxu0 %v798
    %1015 = vmatpush1.bf16.msra.mxu0 %v797
    %1016 = vmatprep.subr.bf16.mxu0 %v794
    %1017 = vmatpush1.bf16.msra.mxu0 %v793
    %1018 = vmatprep.subr.bf16.mxu0 %v790
    %1019 = vmatpush1.bf16.msra.mxu0 %v789
    %1020 = vmatprep.subr.bf16.mxu0 %v786
    %1021 = vmatpush1.bf16.msra.mxu0 %v785
    %1022 = vmatprep.subr.bf16.mxu0 %v782
    %1023 = vmatpush1.bf16.msra.mxu0 %v781
    %1024 = vmatprep.subr.bf16.mxu0 %v778
    %1025 = vmatpush1.bf16.msra.mxu0 %v777
    %1026 = vmatprep.subr.bf16.mxu0 %v838
    %1027 = vmatpush2.bf16.msra.mxu0 %v837
    %1028 = vmatprep.subr.bf16.mxu0 %v834
    %1029 = vmatpush2.bf16.msra.mxu0 %v833
    %1030 = vmatprep.subr.bf16.mxu0 %v830
    %1031 = vmatpush2.bf16.msra.mxu0 %v829
    %1032 = vmatprep.subr.bf16.mxu0 %v826
    %1033 = vmatpush2.bf16.msra.mxu0 %v825
    %1034 = vmatprep.subr.bf16.mxu0 %v822
    %1035 = vmatpush2.bf16.msra.mxu0 %v821
    %1036 = vmatprep.subr.bf16.mxu0 %v818
    %1037 = vmatpush2.bf16.msra.mxu0 %v817
    %1038 = vmatprep.subr.bf16.mxu0 %v814
    %1039 = vmatpush2.bf16.msra.mxu0 %v813
    %1040 = vmatprep.subr.bf16.mxu0 %v810
    %1041 = vmatpush2.bf16.msra.mxu0 %v809
    %1042 = vmatprep.mubr.bf16.mxu0 %v179
    %1043 = vmatmul.mubr.bf16.gmra.mxu0 %v178
    %v1044 = vpop.f32.mrf.mxu0
    %v1045 = vadd.f32 %v1004, %v1044
    %v1046 = vpop.f32.mrf.mxu0
    %v1047 = vadd.f32 %v1006, %v1046
    %v1048 = vpop.f32.mrf.mxu0
    %v1049 = vpop.f32.mrf.mxu0
    %1050 = vdwg.mxu0
    %1051 = vmatprep.subr.bf16.mxu0 %v744
    %1052 = vmatpush1.bf16.msra.mxu0 %v743
    %1053 = vmatprep.subr.bf16.mxu0 %v740
    %1054 = vmatpush1.bf16.msra.mxu0 %v739
    %1055 = vmatprep.subr.bf16.mxu0 %v736
    %1056 = vmatpush1.bf16.msra.mxu0 %v735
    %1057 = vmatprep.subr.bf16.mxu0 %v732
    %1058 = vmatpush1.bf16.msra.mxu0 %v731
    %1059 = vmatprep.subr.bf16.mxu0 %v728
    %1060 = vmatpush1.bf16.msra.mxu0 %v727
    %1061 = vmatprep.subr.bf16.mxu0 %v724
    %1062 = vmatpush1.bf16.msra.mxu0 %v723
    %1063 = vmatprep.subr.bf16.mxu0 %v720
    %1064 = vmatpush1.bf16.msra.mxu0 %v719
    %1065 = vmatprep.subr.bf16.mxu0 %v716
    %1066 = vmatpush1.bf16.msra.mxu0 %v715
    %1067 = vmatprep.subr.bf16.mxu0 %v776
    %1068 = vmatpush2.bf16.msra.mxu0 %v775
    %1069 = vmatprep.subr.bf16.mxu0 %v772
    %1070 = vmatpush2.bf16.msra.mxu0 %v771
    %1071 = vmatprep.subr.bf16.mxu0 %v768
    %1072 = vmatpush2.bf16.msra.mxu0 %v767
    %1073 = vmatprep.subr.bf16.mxu0 %v764
    %1074 = vmatpush2.bf16.msra.mxu0 %v763
    %1075 = vmatprep.subr.bf16.mxu0 %v760
    %1076 = vmatpush2.bf16.msra.mxu0 %v759
    %1077 = vmatprep.subr.bf16.mxu0 %v756
    %1078 = vmatpush2.bf16.msra.mxu0 %v755
    %1079 = vmatprep.subr.bf16.mxu0 %v752
    %1080 = vmatpush2.bf16.msra.mxu0 %v751
    %1081 = vmatprep.subr.bf16.mxu0 %v748
    %1082 = vmatpush2.bf16.msra.mxu0 %v747
    %1083 = vmatprep.mubr.bf16.mxu0 %v177
    %1084 = vmatmul.mubr.bf16.gmra.mxu0 %v176
    %v1085 = vpop.f32.mrf.mxu0
    %v1086 = vadd.f32 %v320, %v1085
    %v1087 = vpop.f32.mrf.mxu0
    %v1088 = vadd.f32 %v324, %v1087
    %v1089 = vpop.f32.mrf.mxu0
    %v1090 = vpop.f32.mrf.mxu0
    %1091 = vdwg.mxu0
    %1092 = vmatprep.subr.bf16.mxu0 %v808
    %1093 = vmatpush1.bf16.msra.mxu0 %v807
    %1094 = vmatprep.subr.bf16.mxu0 %v804
    %1095 = vmatpush1.bf16.msra.mxu0 %v803
    %1096 = vmatprep.subr.bf16.mxu0 %v800
    %1097 = vmatpush1.bf16.msra.mxu0 %v799
    %1098 = vmatprep.subr.bf16.mxu0 %v796
    %1099 = vmatpush1.bf16.msra.mxu0 %v795
    %1100 = vmatprep.subr.bf16.mxu0 %v792
    %1101 = vmatpush1.bf16.msra.mxu0 %v791
    %1102 = vmatprep.subr.bf16.mxu0 %v788
    %1103 = vmatpush1.bf16.msra.mxu0 %v787
    %1104 = vmatprep.subr.bf16.mxu0 %v784
    %1105 = vmatpush1.bf16.msra.mxu0 %v783
    %1106 = vmatprep.subr.bf16.mxu0 %v780
    %1107 = vmatpush1.bf16.msra.mxu0 %v779
    %1108 = vmatprep.subr.bf16.mxu0 %v840
    %1109 = vmatpush2.bf16.msra.mxu0 %v839
    %1110 = vmatprep.subr.bf16.mxu0 %v836
    %1111 = vmatpush2.bf16.msra.mxu0 %v835
    %1112 = vmatprep.subr.bf16.mxu0 %v832
    %1113 = vmatpush2.bf16.msra.mxu0 %v831
    %1114 = vmatprep.subr.bf16.mxu0 %v828
    %1115 = vmatpush2.bf16.msra.mxu0 %v827
    %1116 = vmatprep.subr.bf16.mxu0 %v824
    %1117 = vmatpush2.bf16.msra.mxu0 %v823
    %1118 = vmatprep.subr.bf16.mxu0 %v820
    %1119 = vmatpush2.bf16.msra.mxu0 %v819
    %1120 = vmatprep.subr.bf16.mxu0 %v816
    %1121 = vmatpush2.bf16.msra.mxu0 %v815
    %1122 = vmatprep.subr.bf16.mxu0 %v812
    %1123 = vmatpush2.bf16.msra.mxu0 %v811
    %1124 = vmatprep.mubr.bf16.mxu0 %v179
    %1125 = vmatmul.mubr.bf16.gmra.mxu0 %v178
    %v1126 = vpop.f32.mrf.mxu0
    %v1127 = vadd.f32 %v1086, %v1126
    %v1128 = vpop.f32.mrf.mxu0
    %v1129 = vadd.f32 %v1088, %v1128
    %v1130 = vpop.f32.mrf.mxu0
    %v1131 = vpop.f32.mrf.mxu0
    %1132 = vdwg.mxu0
    %v1133 = vmax.f32 %v1045, 0.0
    %v1134 = vmax.f32 %v1047, 0.0
    %v1135 = vmax.f32 %v1127, 0.0
    %v1136 = vmax.f32 %v1129, 0.0
    %v1137 = vpack.c.bf16 %v1133, %v1133
    %v1138 = vpack.c.bf16 %v1134, %v1134
    %v1139 = vpack.c.bf16 %v1135, %v1135
    %v1140 = vpack.c.bf16 %v1136, %v1136
    %v1141 = vld [vmem:[%s3] sm:$0xf]
    %v1142 = vld [vmem:[%s3 + $0x4] sm:$0xf]
    %v1143 = vld [vmem:[%s3 + $0x8] sm:$0xf]
    %v1144 = vld [vmem:[%s3 + $0xc] sm:$0xf]
    %v1145 = vld [vmem:[%s3 + $0x10] sm:$0xf]
    %v1146 = vld [vmem:[%s3 + $0x14] sm:$0xf]
    %v1147 = vld [vmem:[%s3 + $0x18] sm:$0xf]
    %v1148 = vld [vmem:[%s3 + $0x1c] sm:$0xf]
    %v1149 = vld [vmem:[%s3 + $0x20] sm:$0xf]
    %v1150 = vld [vmem:[%s3 + $0x24] sm:$0xf]
    %v1151 = vld [vmem:[%s3 + $0x28] sm:$0xf]
    %v1152 = vld [vmem:[%s3 + $0x2c] sm:$0xf]
    %v1153 = vld [vmem:[%s3 + $0x30] sm:$0xf]
    %v1154 = vld [vmem:[%s3 + $0x34] sm:$0xf]
    %v1155 = vld [vmem:[%s3 + $0x38] sm:$0xf]
    %v1156 = vld [vmem:[%s3 + $0x3c] sm:$0xf]
    %v1157 = vld [vmem:[%s3 + $0x40] sm:$0xf]
    %v1158 = vld [vmem:[%s3 + $0x44] sm:$0xf]
    %v1159 = vld [vmem:[%s3 + $0x48] sm:$0xf]
    %v1160 = vld [vmem:[%s3 + $0x4c] sm:$0xf]
    %v1161 = vld [vmem:[%s3 + $0x50] sm:$0xf]
    %v1162 = vld [vmem:[%s3 + $0x54] sm:$0xf]
    %v1163 = vld [vmem:[%s3 + $0x58] sm:$0xf]
    %v1164 = vld [vmem:[%s3 + $0x5c] sm:$0xf]
    %v1165 = vld [vmem:[%s3 + $0x60] sm:$0xf]
    %v1166 = vld [vmem:[%s3 + $0x64] sm:$0xf]
    %v1167 = vld [vmem:[%s3 + $0x68] sm:$0xf]
    %v1168 = vld [vmem:[%s3 + $0x6c] sm:$0xf]
    %v1169 = vld [vmem:[%s3 + $0x70] sm:$0xf]
    %v1170 = vld [vmem:[%s3 + $0x74] sm:$0xf]
    %v1171 = vld [vmem:[%s3 + $0x78] sm:$0xf]
    %v1172 = vld [vmem:[%s3 + $0x7c] sm:$0xf]
    %v1173 = vld [vmem:[%s3 + $0x80] sm:$0xf]
    %v1174 = vld [vmem:[%s3 + $0x84] sm:$0xf]
    %v1175 = vld [vmem:[%s3 + $0x88] sm:$0xf]
    %v1176 = vld [vmem:[%s3 + $0x8c] sm:$0xf]
    %v1177 = vld [vmem:[%s3 + $0x90] sm:$0xf]
    %v1178 = vld [vmem:[%s3 + $0x94] sm:$0xf]
    %v1179 = vld [vmem:[%s3 + $0x98] sm:$0xf]
    %v1180 = vld [vmem:[%s3 + $0x9c] sm:$0xf]
    %v1181 = vld [vmem:[%s3 + $0xa0] sm:$0xf]
    %v1182 = vld [vmem:[%s3 + $0xa4] sm:$0xf]
    %v1183 = vld [vmem:[%s3 + $0xa8] sm:$0xf]
    %v1184 = vld [vmem:[%s3 + $0xac] sm:$0xf]
    %v1185 = vld [vmem:[%s3 + $0xb0] sm:$0xf]
    %v1186 = vld [vmem:[%s3 + $0xb4] sm:$0xf]
    %v1187 = vld [vmem:[%s3 + $0xb8] sm:$0xf]
    %v1188 = vld [vmem:[%s3 + $0xbc] sm:$0xf]
    %v1189 = vld [vmem:[%s3 + $0xc0] sm:$0xf]
    %v1190 = vld [vmem:[%s3 + $0xc4] sm:$0xf]
    %v1191 = vld [vmem:[%s3 + $0xc8] sm:$0xf]
    %v1192 = vld [vmem:[%s3 + $0xcc] sm:$0xf]
    %v1193 = vld [vmem:[%s3 + $0xd0] sm:$0xf]
    %v1194 = vld [vmem:[%s3 + $0xd4] sm:$0xf]
    %v1195 = vld [vmem:[%s3 + $0xd8] sm:$0xf]
    %v1196 = vld [vmem:[%s3 + $0xdc] sm:$0xf]
    %v1197 = vld [vmem:[%s3 + $0xe0] sm:$0xf]
    %v1198 = vld [vmem:[%s3 + $0xe4] sm:$0xf]
    %v1199 = vld [vmem:[%s3 + $0xe8] sm:$0xf]
    %v1200 = vld [vmem:[%s3 + $0xec] sm:$0xf]
    %v1201 = vld [vmem:[%s3 + $0xf0] sm:$0xf]
    %v1202 = vld [vmem:[%s3 + $0xf4] sm:$0xf]
    %v1203 = vld [vmem:[%s3 + $0xf8] sm:$0xf]
    %v1204 = vld [vmem:[%s3 + $0xfc] sm:$0xf]
    %v1206 = vlaneseq
    %v1207 = vshrl.u32 %v1206, 7
    %v1208 = vsub.s32 0, %v1207
    %v1209 = vrot.slane %v38, %v1208
    %v1275 = vunpack.c.l.b16 %v1141
    %v1276 = vunpack.c.l.b16 %v1142
    %v1277 = vunpack.c.l.b16 %v1143
    %v1278 = vunpack.c.l.b16 %v1144
    %v1279 = vunpack.c.l.b16 %v1145
    %v1280 = vunpack.c.l.b16 %v1146
    %v1281 = vunpack.c.l.b16 %v1147
    %v1282 = vunpack.c.l.b16 %v1148
    %v1283 = vunpack.c.l.b16 %v1149
    %v1284 = vunpack.c.l.b16 %v1150
    %v1285 = vunpack.c.l.b16 %v1151
    %v1286 = vunpack.c.l.b16 %v1152
    %v1287 = vunpack.c.l.b16 %v1153
    %v1288 = vunpack.c.l.b16 %v1154
    %v1289 = vunpack.c.l.b16 %v1155
    %v1290 = vunpack.c.l.b16 %v1156
    %v1291 = vunpack.c.l.b16 %v1157
    %v1292 = vunpack.c.l.b16 %v1158
    %v1293 = vunpack.c.l.b16 %v1159
    %v1294 = vunpack.c.l.b16 %v1160
    %v1295 = vunpack.c.l.b16 %v1161
    %v1296 = vunpack.c.l.b16 %v1162
    %v1297 = vunpack.c.l.b16 %v1163
    %v1298 = vunpack.c.l.b16 %v1164
    %v1299 = vunpack.c.l.b16 %v1165
    %v1300 = vunpack.c.l.b16 %v1166
    %v1301 = vunpack.c.l.b16 %v1167
    %v1302 = vunpack.c.l.b16 %v1168
    %v1303 = vunpack.c.l.b16 %v1169
    %v1304 = vunpack.c.l.b16 %v1170
    %v1305 = vunpack.c.l.b16 %v1171
    %v1306 = vunpack.c.l.b16 %v1172
    %v1307 = vunpack.c.l.b16 %v1173
    %v1308 = vunpack.c.l.b16 %v1174
    %v1309 = vunpack.c.l.b16 %v1175
    %v1310 = vunpack.c.l.b16 %v1176
    %v1311 = vunpack.c.l.b16 %v1177
    %v1312 = vunpack.c.l.b16 %v1178
    %v1313 = vunpack.c.l.b16 %v1179
    %v1314 = vunpack.c.l.b16 %v1180
    %v1315 = vunpack.c.l.b16 %v1181
    %v1316 = vunpack.c.l.b16 %v1182
    %v1317 = vunpack.c.l.b16 %v1183
    %v1318 = vunpack.c.l.b16 %v1184
    %v1319 = vunpack.c.l.b16 %v1185
    %v1320 = vunpack.c.l.b16 %v1186
    %v1321 = vunpack.c.l.b16 %v1187
    %v1322 = vunpack.c.l.b16 %v1188
    %v1323 = vunpack.c.l.b16 %v1189
    %v1324 = vunpack.c.l.b16 %v1190
    %v1325 = vunpack.c.l.b16 %v1191
    %v1326 = vunpack.c.l.b16 %v1192
    %v1327 = vunpack.c.l.b16 %v1193
    %v1328 = vunpack.c.l.b16 %v1194
    %v1329 = vunpack.c.l.b16 %v1195
    %v1330 = vunpack.c.l.b16 %v1196
    %v1331 = vunpack.c.l.b16 %v1197
    %v1332 = vunpack.c.l.b16 %v1198
    %v1333 = vunpack.c.l.b16 %v1199
    %v1334 = vunpack.c.l.b16 %v1200
    %v1335 = vunpack.c.l.b16 %v1201
    %v1336 = vunpack.c.l.b16 %v1202
    %v1337 = vunpack.c.l.b16 %v1203
    %v1338 = vunpack.c.l.b16 %v1204
    %v1339 = vpack.c.b16 %v1276, %v1275
    %v1340 = vpack.c.b16 %v1278, %v1277
    %v1341 = vpack.c.b16 %v1280, %v1279
    %v1342 = vpack.c.b16 %v1282, %v1281
    %v1343 = vpack.c.b16 %v1284, %v1283
    %v1344 = vpack.c.b16 %v1286, %v1285
    %v1345 = vpack.c.b16 %v1288, %v1287
    %v1346 = vpack.c.b16 %v1290, %v1289
    %v1347 = vpack.c.b16 %v1292, %v1291
    %v1348 = vpack.c.b16 %v1294, %v1293
    %v1349 = vpack.c.b16 %v1296, %v1295
    %v1350 = vpack.c.b16 %v1298, %v1297
    %v1351 = vpack.c.b16 %v1300, %v1299
    %v1352 = vpack.c.b16 %v1302, %v1301
    %v1353 = vpack.c.b16 %v1304, %v1303
    %v1354 = vpack.c.b16 %v1306, %v1305
    %v1355 = vpack.c.b16 %v1308, %v1307
    %v1356 = vpack.c.b16 %v1310, %v1309
    %v1357 = vpack.c.b16 %v1312, %v1311
    %v1358 = vpack.c.b16 %v1314, %v1313
    %v1359 = vpack.c.b16 %v1316, %v1315
    %v1360 = vpack.c.b16 %v1318, %v1317
    %v1361 = vpack.c.b16 %v1320, %v1319
    %v1362 = vpack.c.b16 %v1322, %v1321
    %v1363 = vpack.c.b16 %v1324, %v1323
    %v1364 = vpack.c.b16 %v1326, %v1325
    %v1365 = vpack.c.b16 %v1328, %v1327
    %v1366 = vpack.c.b16 %v1330, %v1329
    %v1367 = vpack.c.b16 %v1332, %v1331
    %v1368 = vpack.c.b16 %v1334, %v1333
    %v1369 = vpack.c.b16 %v1336, %v1335
    %v1370 = vpack.c.b16 %v1338, %v1337
    %1403 = vmatprep.subr.bf16.mxu0 0
    %1404 = vmatpush1.bf16.msra.mxu0 %v1346
    %1405 = vmatprep.subr.bf16.mxu0 0
    %1406 = vmatpush1.bf16.msra.mxu0 %v1345
    %1407 = vmatprep.subr.bf16.mxu0 0
    %1408 = vmatpush1.bf16.msra.mxu0 %v1344
    %1409 = vmatprep.subr.bf16.mxu0 0
    %1410 = vmatpush1.bf16.msra.mxu0 %v1343
    %1411 = vmatprep.subr.bf16.mxu0 0
    %1412 = vmatpush1.bf16.msra.mxu0 %v1342
    %1413 = vmatprep.subr.bf16.mxu0 0
    %1414 = vmatpush1.bf16.msra.mxu0 %v1341
    %1415 = vmatprep.subr.bf16.mxu0 0
    %1416 = vmatpush1.bf16.msra.mxu0 %v1340
    %1417 = vmatprep.subr.bf16.mxu0 0
    %1418 = vmatpush1.bf16.msra.mxu0 %v1339
    %1419 = vmatprep.subr.bf16.mxu0 0
    %1420 = vmatpush2.bf16.msra.mxu0 %v1354
    %1421 = vmatprep.subr.bf16.mxu0 0
    %1422 = vmatpush2.bf16.msra.mxu0 %v1353
    %1423 = vmatprep.subr.bf16.mxu0 0
    %1424 = vmatpush2.bf16.msra.mxu0 %v1352
    %1425 = vmatprep.subr.bf16.mxu0 0
    %1426 = vmatpush2.bf16.msra.mxu0 %v1351
    %1427 = vmatprep.subr.bf16.mxu0 0
    %1428 = vmatpush2.bf16.msra.mxu0 %v1350
    %1429 = vmatprep.subr.bf16.mxu0 0
    %1430 = vmatpush2.bf16.msra.mxu0 %v1349
    %1431 = vmatprep.subr.bf16.mxu0 0
    %1432 = vmatpush2.bf16.msra.mxu0 %v1348
    %1433 = vmatprep.subr.bf16.mxu0 0
    %1434 = vmatpush2.bf16.msra.mxu0 %v1347
    %1435 = vmatprep.mubr.bf16.mxu0 %v1138
    %1436 = vmatmul.mubr.bf16.gmra.mxu0 %v1137
    %v1437 = vpop.f32.mrf.mxu0
    %v1438 = vadd.f32 %v1209, %v1437
    %v1439 = vpop.f32.mrf.mxu0
    %v1440 = vpop.f32.mrf.mxu0
    %v1441 = vpop.f32.mrf.mxu0
    %1442 = vdwg.mxu0
    %1443 = vmatprep.subr.bf16.mxu0 0
    %1444 = vmatpush1.bf16.msra.mxu0 %v1362
    %1445 = vmatprep.subr.bf16.mxu0 0
    %1446 = vmatpush1.bf16.msra.mxu0 %v1361
    %1447 = vmatprep.subr.bf16.mxu0 0
    %1448 = vmatpush1.bf16.msra.mxu0 %v1360
    %1449 = vmatprep.subr.bf16.mxu0 0
    %1450 = vmatpush1.bf16.msra.mxu0 %v1359
    %1451 = vmatprep.subr.bf16.mxu0 0
    %1452 = vmatpush1.bf16.msra.mxu0 %v1358
    %1453 = vmatprep.subr.bf16.mxu0 0
    %1454 = vmatpush1.bf16.msra.mxu0 %v1357
    %1455 = vmatprep.subr.bf16.mxu0 0
    %1456 = vmatpush1.bf16.msra.mxu0 %v1356
    %1457 = vmatprep.subr.bf16.mxu0 0
    %1458 = vmatpush1.bf16.msra.mxu0 %v1355
    %1459 = vmatprep.subr.bf16.mxu0 0
    %1460 = vmatpush2.bf16.msra.mxu0 %v1370
    %1461 = vmatprep.subr.bf16.mxu0 0
    %1462 = vmatpush2.bf16.msra.mxu0 %v1369
    %1463 = vmatprep.subr.bf16.mxu0 0
    %1464 = vmatpush2.bf16.msra.mxu0 %v1368
    %1465 = vmatprep.subr.bf16.mxu0 0
    %1466 = vmatpush2.bf16.msra.mxu0 %v1367
    %1467 = vmatprep.subr.bf16.mxu0 0
    %1468 = vmatpush2.bf16.msra.mxu0 %v1366
    %1469 = vmatprep.subr.bf16.mxu0 0
    %1470 = vmatpush2.bf16.msra.mxu0 %v1365
    %1471 = vmatprep.subr.bf16.mxu0 0
    %1472 = vmatpush2.bf16.msra.mxu0 %v1364
    %1473 = vmatprep.subr.bf16.mxu0 0
    %1474 = vmatpush2.bf16.msra.mxu0 %v1363
    %1475 = vmatprep.mubr.bf16.mxu0 %v1140
    %1476 = vmatmul.mubr.bf16.gmra.mxu0 %v1139
    %v1477 = vpop.f32.mrf.mxu0
    %v1478 = vadd.f32 %v1438, %v1477
    %v1479 = vpop.f32.mrf.mxu0
    %v1480 = vpop.f32.mrf.mxu0
    %v1481 = vpop.f32.mrf.mxu0
    %1482 = vdwg.mxu0
    %v1483 = vtanh.pop %v1478
    %v1484 = vadd.f32 %v1483, 1.0
    %v1485 = vmul.f32 %v1484, 3.5
    %v1486 = vadd.f32 %v1485, -5.0
    %v1487 = vlaneseq
    %v1488 = vand.u32 %v1487, 127
    %vm1489 = vcmp.lt.s32.totalorder %v1488, 8
    %v1490 = vsel %vm1489, %v1478, %v1486
    %1491 = vst.msk [vmem:[#allocation5] sm:$0xff] %vm86, %v1490
    // Predicated region
    $region26: #{tpu_custom_call.1} parent=1 // pred_check
      _
    $region27: #{tpu_custom_call.1} parent=1 // pred_check_branch
      %1493 = sbr.rel (0) target = $region29
    $region28: #{tpu_custom_call.1} parent=1 // pred_region
      %s1495 = ssub.s32 128, 128
      %1496 = vsyncadd [#allocation4], %s1495
      %s1498 = sshll.u32 [#allocation5], 4
      %s1499 = int_to_ptr.vmem [resolvable:$true] %s1498
      %1501 = dma.vmem_to_hbm [thread:$0]  %s1499, 128, %s5, [#allocation4]
    $region29: #{tpu_custom_call.1} parent=1 // pred_fallthru
      _
    // Predicated region
    $region30: #{tpu_custom_call.1} parent=1 // pred_check
      _
    $region31: #{tpu_custom_call.1} parent=1 // pred_check_branch
      %1503 = sbr.rel (0) target = $region33
    $region32: #{tpu_custom_call.1} parent=1 // pred_region
      %1504 = dma.done [#allocation4], 128
    $region33: #{tpu_custom_call.1} parent=1 // pred_fallthru
      _
    %1505 = vsyncpa [#allocation3], 1
    %1506 = vsyncpa [#allocation4], 1

</llo_original>
